<compile_context>
chip_gen: v7x
topology: tpu7x:2x2x1
jax: 0.10.0
libtpu: 0.0.40
codegen_flags: <defaults>
</compile_context>

<pallas_src>
import jax
import jax.numpy as jnp
from jax.experimental import pallas as pl
from jax.experimental.pallas import tpu as pltpu

LANE = 128   # lane width of a vreg
SUB = 8      # sublane tile


def _round_up(a, b):
    return (a + b - 1) // b * b


def _metalstm_kernel(w_ref, x_ref, s_ref, fi_ref, c_ref, g_ref, fi_out, c_out):
    """One tile of `tr` sublane-rows x 128 parameter lanes.

    w_ref  (SMEM, f32, (6,)): [Wf_c, Wf_h, Wi_c, Wi_h, bf, bi]
    x_ref  : (tr, 128*D)  feature-interleaved params (row-major view of padded x)
    s_ref  : (128*D, 256) constant gate-selection/weight matrix [S_f | S_i]
    fi_ref : (2, tr, 128) [f_prev, i_prev]      c_ref/g_ref : (tr, 128)
    fi_out : (2, tr, 128) [f_next, i_next]      c_out       : (tr, 128) f32
    """
    f32 = jnp.float32
    c_prev = c_ref[...]                       # stored f32
    f_prev = fi_ref[0].astype(f32)
    i_prev = fi_ref[1].astype(f32)
    grad = g_ref[...].astype(f32)

    # De-interleave + per-feature weighted sum for both gates on the (idle) MXU.
    # (Pass precision=lax.Precision.HIGHEST here for exact-f32 pre-activations; the
    #  tiny sigmoid slope at these bias ranges makes default precision ample.)
    xg = jnp.dot(x_ref[...], s_ref[...], preferred_element_type=f32)  # (tr, 256)
    xf = xg[:, :LANE]
    xi = xg[:, LANE:]

    f_pre = xf + w_ref[0] * c_prev + w_ref[1] * f_prev + w_ref[4]
    i_pre = xi + w_ref[2] * c_prev + w_ref[3] * i_prev + w_ref[5]

    f_next = jax.nn.sigmoid(f_pre)            # EUP
    i_next = jax.nn.sigmoid(i_pre)

    c_out[...] = f_next * c_prev - i_next * grad
    fi_out[0] = f_next.astype(fi_out.dtype)
    fi_out[1] = i_next.astype(fi_out.dtype)


# --------------------------------------------------------------------------- packing
def slab_rows(n_params):
    """Sublane rows of the lane-dense slabs for n_params (padding <= 1023 params)."""
    return _round_up(pl.cdiv(n_params, LANE), SUB)


def pack_lane_slab(v, R, dtype):
    """(B,) / (B,1) -> (R, 128) lane-dense slab."""
    v = v.reshape(-1).astype(dtype)
    return jnp.pad(v, (0, R * LANE - v.shape[0])).reshape(R, LANE)


def pack_x(x, R, dtype):
    """(B, D) -> (R, 128*D): row pad + a free contiguous reshape (NO transpose)."""
    B, D = x.shape
    xp = jnp.pad(x.astype(dtype), ((0, R * LANE - B), (0, 0)))
    return xp.reshape(R, LANE * D)


def build_weight_tables(params, D, stream_dt):
    """SMEM scalar vector + constant gate selection/weight matrix for the MXU."""
    Wf, Wi, bf, bi = params["Wf"], params["Wi"], params["bf"], params["bi"]
    w_all = jnp.stack([Wf[D, 0], Wf[D + 1, 0], Wi[D, 0], Wi[D + 1, 0],
                       bf[0, 0], bi[0, 0]]).astype(jnp.float32)
    c_idx = jnp.arange(LANE * D)
    sel = (c_idx // D)[:, None] == jnp.arange(LANE)[None, :]          # (128D, 128)
    sf = jnp.where(sel, Wf[c_idx % D, 0][:, None], 0.0)
    si = jnp.where(sel, Wi[c_idx % D, 0][:, None], 0.0)
    s_cat = jnp.concatenate([sf, si], axis=1).astype(stream_dt)       # (128D, 256)
    return w_all, s_cat


# ------------------------------------------------------------------ slab-native core
def meta_lstm_cell_slabs(w_all, s_cat, x_rows, grad_slab, fi_prev, c_prev, *,
                         rows_per_step=1024):
    """Steady-state entry point: all operands / results are packed slabs."""
    R, LD = x_rows.shape
    D = LD // LANE
    assert LD == D * LANE and R % SUB == 0
    assert fi_prev.shape == (2, R, LANE) and c_prev.shape == (R, LANE)
    assert grad_slab.shape == (R, LANE) and c_prev.dtype == jnp.float32
    stream_dt = x_rows.dtype

    # Row-tile policy: cap at rows_per_step and force >= 2 grid steps whenever there is
    # more than one sublane tile of work, so the "parallel" axis shards across v7x's
    # two TensorCores (no effect on v5e/v6e).
    max_tr = min(_round_up(rows_per_step, SUB), R)
    min_steps = 2 if R > SUB else 1
    steps = max(min_steps, pl.cdiv(R, max_tr))
    tr = min(_round_up(pl.cdiv(R, steps), SUB), R)
    grid = (pl.cdiv(R, tr),)

    # Explicit VMEM budget (v5e scoped default is only 16 MiB).
    bpe = jnp.dtype(stream_dt).itemsize
    per_step = tr * LANE * (D * bpe + 2 * bpe + 4 + bpe + 2 * bpe + 4)
    s_bytes = s_cat.size * bpe
    vmem_limit = int(min(max(2 * per_step + 2 * s_bytes + (2 << 20), 16 << 20), 40 << 20))

    row_spec = pl.BlockSpec((tr, LANE), lambda i: (i, 0))
    fi_spec = pl.BlockSpec((2, tr, LANE), lambda i: (0, i, 0))

    fi_next, c_next = pl.pallas_call(
        _metalstm_kernel,
        out_shape=(jax.ShapeDtypeStruct((2, R, LANE), stream_dt),
                   jax.ShapeDtypeStruct((R, LANE), jnp.float32)),
        grid=grid,
        in_specs=[pl.BlockSpec(memory_space=pltpu.MemorySpace.SMEM),   # 6 gate scalars
                  pl.BlockSpec((tr, LD), lambda i: (i, 0)),            # x (interleaved)
                  pl.BlockSpec((LD, 2 * LANE), lambda i: (0, 0)),      # constant S (DMA elided)
                  fi_spec,                                             # [f_prev, i_prev]
                  row_spec,                                            # c_prev (f32)
                  row_spec],                                           # grad
        out_specs=(fi_spec, row_spec),
        compiler_params=pltpu.CompilerParams(
            dimension_semantics=("parallel",),
            vmem_limit_bytes=vmem_limit),
    )(w_all, x_rows, s_cat, fi_prev, c_prev, grad_slab)
    return fi_next, c_next


# ------------------------------------------------------- PyTorch-shaped convenience
def meta_learner_lstm_cell(x, grad_noprocess, params, hidden_state=None, *,
                           rows_per_step=1024, stream_dtype=None):
    """Forward pass matching MetaLearnerLSTMCell.forward.

    x: (B, input_size) -- B == n_params; grad_noprocess: (B, 1).
    Returns (c_next, [f_next, i_next, c_next]) with shapes (B, 1).
    For the steady-state meta-learning loop prefer `meta_lstm_cell_slabs` (keeps the
    hidden state packed; c is always stored f32, x/grad/f/i follow `stream_dtype`).
    """
    B, D = x.shape
    H = params["Wf"].shape[1]
    assert H == 1, "module only type-checks with hidden_size == 1"
    stream_dt = x.dtype if stream_dtype is None else stream_dtype

    R = slab_rows(B)
    w_all, s_cat = build_weight_tables(params, D, stream_dt)
    x_rows = pack_x(x, R, stream_dt)
    g_slab = pack_lane_slab(grad_noprocess, R, stream_dt)

    if hidden_state is None:
        fi_prev = jnp.zeros((2, R, LANE), stream_dt)
        c_prev = pack_lane_slab(params["ct"], R, jnp.float32)
    else:
        f_p, i_p, c_p = hidden_state
        fi_prev = jnp.stack([pack_lane_slab(f_p, R, stream_dt),
                             pack_lane_slab(i_p, R, stream_dt)])
        c_prev = pack_lane_slab(c_p, R, jnp.float32)

    fi_next, c_next = meta_lstm_cell_slabs(w_all, s_cat, x_rows, g_slab,
                                           fi_prev, c_prev,
                                           rows_per_step=rows_per_step)
    f_n = fi_next[0].reshape(-1)[:B].reshape(B, 1)
    i_n = fi_next[1].reshape(-1)[:B].reshape(B, 1)
    c_n = c_next.reshape(-1)[:B].reshape(B, 1)
    return c_n, [f_n, i_n, c_n]


def init_params(key, input_size, hidden_size, n_params, dtype=jnp.float32):
    """Deterministic init matching MetaLearnerLSTMCell.initialize_parameters."""
    k = jax.random.split(key, 5)
    u = lambda kk, shape, lo, hi: jax.random.uniform(kk, shape, dtype, lo, hi)
    return {
        "Wf": u(k[0], (input_size + 2, hidden_size), -0.01, 0.01),
        "Wi": u(k[1], (input_size + 2, hidden_size), -0.01, 0.01),
        "bi": u(k[2], (1, hidden_size), -5.0, -4.0),
        "bf": u(k[3], (1, hidden_size), 4.0, 6.0),
        "ct": u(k[4], (n_params, 1), -0.01, 0.01),
    }


def _reference(x, grad_noprocess, params, hidden_state=None):
    """Pure-JAX transcription of the PyTorch forward, for verification."""
    Wf, Wi, bf, bi, ct = (params["Wf"], params["Wi"], params["bf"],
                          params["bi"], params["ct"])
    B = x.shape[0]
    H = Wf.shape[1]
    if hidden_state is None:
        f_prev = jnp.zeros((B, H), x.dtype)
        i_prev = jnp.zeros((B, H), x.dtype)
        c_prev = ct
    else:
        f_prev, i_prev, c_prev = hidden_state
    f_next = jax.nn.sigmoid(jnp.concatenate([x, c_prev, f_prev], 1) @ Wf + bf)
    i_next = jax.nn.sigmoid(jnp.concatenate([x, c_prev, i_prev], 1) @ Wi + bi)
    c_next = f_next * c_prev - i_next * grad_noprocess
    return c_next, [f_next, i_next, c_next]


if __name__ == "__main__":
    input_size = 4     # preprocessed (loss, grad) statistics
    hidden_size = 1    # required by the module's cat/matmul shapes
    n_params = 2000    # learner-parameter "batch" (exercises padding + 2-step grid)

    key = jax.random.PRNGKey(0)
    kp, kx, kg = jax.random.split(key, 3)
    params = init_params(kp, input_size, hidden_size, n_params)
    x = jax.random.normal(kx, (n_params, input_size), jnp.float32)
    grad = jax.random.normal(kg, (n_params, 1), jnp.float32)

    # Step 1: PyTorch-compatible entry (hidden_state=None -> f=i=0, c=ct).
    c1, hs1 = meta_learner_lstm_cell(x, grad, params)

    # Steps 1+2 again via the slab-native steady-state path (state never unpacked).
    R = slab_rows(n_params)
    stream_dt = x.dtype
    w_all, s_cat = build_weight_tables(params, input_size, stream_dt)
    x_rows = pack_x(x, R, stream_dt)
    g_slab = pack_lane_slab(grad, R, stream_dt)
    fi0 = jnp.zeros((2, R, LANE), stream_dt)
    c0 = pack_lane_slab(params["ct"], R, jnp.float32)
    fi1, c1_slab = meta_lstm_cell_slabs(w_all, s_cat, x_rows, g_slab, fi0, c0)
    fi2, c2_slab = meta_lstm_cell_slabs(w_all, s_cat, x_rows, g_slab, fi1, c1_slab)
    jax.block_until_ready((c1, c2_slab))

    # Verify against the plain-JAX reference (two chained steps).
    c1_ref, hs1_ref = _reference(x, grad, params)
    c2_ref, hs2_ref = _reference(x, grad, params, hidden_state=hs1_ref)

    def crop(slab):
        return slab.reshape(-1)[:n_params].reshape(n_params, 1)

    atol, rtol = 1e-4, 1e-4
    assert jnp.allclose(c1, c1_ref, atol=atol, rtol=rtol)
    assert jnp.allclose(hs1[0], hs1_ref[0], atol=atol, rtol=rtol)
    assert jnp.allclose(hs1[1], hs1_ref[1], atol=atol, rtol=rtol)
    assert jnp.allclose(crop(fi2[0]), hs2_ref[0], atol=atol, rtol=rtol)
    assert jnp.allclose(crop(fi2[1]), hs2_ref[1], atol=atol, rtol=rtol)
    assert jnp.allclose(crop(c2_slab), c2_ref, atol=atol, rtol=rtol)

    print("KERNEL_OK")
</pallas_src>

<mosaic_0001>
module attributes {stable_mosaic.version = 11 : i64} {
  func.func @_metalstm_kernel(%arg0: i32, %arg1: memref<6xf32, #tpu.memory_space<smem>>, %arg2: memref<8x512xf32, #tpu.memory_space<vmem>>, %arg3: memref<512x256xf32, #tpu.memory_space<vmem>>, %arg4: memref<2x8x128xf32, #tpu.memory_space<vmem>>, %arg5: memref<8x128xf32, #tpu.memory_space<vmem>>, %arg6: memref<8x128xf32, #tpu.memory_space<vmem>>, %arg7: memref<2x8x128xf32, #tpu.memory_space<vmem>>, %arg8: memref<8x128xf32, #tpu.memory_space<vmem>>) attributes {dimension_semantics = [#tpu.dimension_semantics<parallel>], iteration_bounds = array<i64: 2>, scalar_prefetch = 0 : i64, scratch_operands = 0 : i64, tpu.core_type = #tpu.core_type<tc>, window_params = [{transform_indices = @transform_0, window_bounds = array<i64: 6>}, {transform_indices = @transform_1, window_bounds = array<i64: 8, 512>}, {pipeline_mode = #tpu.pipeline_mode<synchronous>, transform_indices = @transform_2, window_bounds = array<i64: 512, 256>}, {transform_indices = @transform_3, window_bounds = array<i64: 2, 8, 128>}, {transform_indices = @transform_4, window_bounds = array<i64: 8, 128>}, {transform_indices = @transform_5, window_bounds = array<i64: 8, 128>}, {transform_indices = @transform_6, window_bounds = array<i64: 2, 8, 128>}, {transform_indices = @transform_7, window_bounds = array<i64: 8, 128>}]} {
    %c0 = arith.constant 0 : index
    %c0_0 = arith.constant 0 : index
    %0 = vector.load %arg5[%c0, %c0_0] : memref<8x128xf32, #tpu.memory_space<vmem>>, vector<8x128xf32>
    %c0_1 = arith.constant 0 : index
    %c0_2 = arith.constant 0 : index
    %c0_3 = arith.constant 0 : index
    %1 = vector.load %arg4[%c0_1, %c0_2, %c0_3] : memref<2x8x128xf32, #tpu.memory_space<vmem>>, vector<1x8x128xf32>
    %2 = vector.shape_cast %1 : vector<1x8x128xf32> to vector<8x128xf32>
    %c1 = arith.constant 1 : index
    %c0_4 = arith.constant 0 : index
    %c0_5 = arith.constant 0 : index
    %3 = vector.load %arg4[%c1, %c0_4, %c0_5] : memref<2x8x128xf32, #tpu.memory_space<vmem>>, vector<1x8x128xf32>
    %4 = vector.shape_cast %3 : vector<1x8x128xf32> to vector<8x128xf32>
    %c0_6 = arith.constant 0 : index
    %c0_7 = arith.constant 0 : index
    %5 = vector.load %arg6[%c0_6, %c0_7] : memref<8x128xf32, #tpu.memory_space<vmem>>, vector<8x128xf32>
    %c0_8 = arith.constant 0 : index
    %c0_9 = arith.constant 0 : index
    %6 = vector.load %arg2[%c0_8, %c0_9] : memref<8x512xf32, #tpu.memory_space<vmem>>, vector<8x512xf32>
    %c0_10 = arith.constant 0 : index
    %c0_11 = arith.constant 0 : index
    %7 = vector.load %arg3[%c0_10, %c0_11] : memref<512x256xf32, #tpu.memory_space<vmem>>, vector<512x256xf32>
    %cst = arith.constant dense<0.000000e+00> : vector<8x256xf32>
    %8 = tpu.matmul %6, %7, %cst {dimension_numbers = #tpu.dot_dimension_numbers<[1], [0], [0], [1], [0, 0, 1, 1], [], []>} : vector<8x512xf32>, vector<512x256xf32>, vector<8x256xf32> -> vector<8x256xf32>
    %9 = vector.extract_strided_slice %8 {offsets = [0, 0], sizes = [8, 128], strides = [1, 1]} : vector<8x256xf32> to vector<8x128xf32>
    %10 = vector.extract_strided_slice %8 {offsets = [0, 128], sizes = [8, 128], strides = [1, 1]} : vector<8x256xf32> to vector<8x128xf32>
    %c0_12 = arith.constant 0 : index
    %11 = memref.load %arg1[%c0_12] : memref<6xf32, #tpu.memory_space<smem>>
    %12 = vector.broadcast %11 : f32 to vector<8x128xf32>
    %13 = arith.mulf %12, %0 : vector<8x128xf32>
    %14 = arith.addf %9, %13 : vector<8x128xf32>
    %c1_13 = arith.constant 1 : index
    %15 = memref.load %arg1[%c1_13] : memref<6xf32, #tpu.memory_space<smem>>
    %16 = vector.broadcast %15 : f32 to vector<8x128xf32>
    %17 = arith.mulf %16, %2 : vector<8x128xf32>
    %18 = arith.addf %14, %17 : vector<8x128xf32>
    %c4 = arith.constant 4 : index
    %19 = memref.load %arg1[%c4] : memref<6xf32, #tpu.memory_space<smem>>
    %20 = vector.broadcast %19 : f32 to vector<8x128xf32>
    %21 = arith.addf %18, %20 : vector<8x128xf32>
    %c2 = arith.constant 2 : index
    %22 = memref.load %arg1[%c2] : memref<6xf32, #tpu.memory_space<smem>>
    %23 = vector.broadcast %22 : f32 to vector<8x128xf32>
    %24 = arith.mulf %23, %0 : vector<8x128xf32>
    %25 = arith.addf %10, %24 : vector<8x128xf32>
    %c3 = arith.constant 3 : index
    %26 = memref.load %arg1[%c3] : memref<6xf32, #tpu.memory_space<smem>>
    %27 = vector.broadcast %26 : f32 to vector<8x128xf32>
    %28 = arith.mulf %27, %4 : vector<8x128xf32>
    %29 = arith.addf %25, %28 : vector<8x128xf32>
    %c5 = arith.constant 5 : index
    %30 = memref.load %arg1[%c5] : memref<6xf32, #tpu.memory_space<smem>>
    %31 = vector.broadcast %30 : f32 to vector<8x128xf32>
    %32 = arith.addf %29, %31 : vector<8x128xf32>
    %33 = arith.negf %21 : vector<8x128xf32>
    %34 = math.exp %33 : vector<8x128xf32>
    %cst_14 = arith.constant 1.000000e+00 : f32
    %35 = vector.broadcast %cst_14 : f32 to vector<8x128xf32>
    %36 = arith.addf %35, %34 : vector<8x128xf32>
    %37 = arith.divf %35, %36 : vector<8x128xf32>
    %38 = arith.negf %32 : vector<8x128xf32>
    %39 = math.exp %38 : vector<8x128xf32>
    %cst_15 = arith.constant 1.000000e+00 : f32
    %40 = vector.broadcast %cst_15 : f32 to vector<8x128xf32>
    %41 = arith.addf %40, %39 : vector<8x128xf32>
    %42 = arith.divf %40, %41 : vector<8x128xf32>
    %43 = arith.mulf %37, %0 : vector<8x128xf32>
    %44 = arith.mulf %42, %5 : vector<8x128xf32>
    %45 = arith.subf %43, %44 : vector<8x128xf32>
    %c0_16 = arith.constant 0 : index
    %c0_17 = arith.constant 0 : index
    %46 = vector.load %arg8[%c0_16, %c0_17] : memref<8x128xf32, #tpu.memory_space<vmem>>, vector<8x128xf32>
    tpu.vector_store %arg8[%c0_16, %c0_17], %45 {strides = array<i32>} : memref<8x128xf32, #tpu.memory_space<vmem>>, vector<8x128xf32>,
    %c0_18 = arith.constant 0 : index
    %c0_19 = arith.constant 0 : index
    %c0_20 = arith.constant 0 : index
    %47 = vector.load %arg7[%c0_18, %c0_19, %c0_20] : memref<2x8x128xf32, #tpu.memory_space<vmem>>, vector<1x8x128xf32>
    %48 = vector.shape_cast %47 : vector<1x8x128xf32> to vector<8x128xf32>
    %49 = vector.shape_cast %37 : vector<8x128xf32> to vector<1x8x128xf32>
    tpu.vector_store %arg7[%c0_18, %c0_19, %c0_20], %49 {strides = array<i32>} : memref<2x8x128xf32, #tpu.memory_space<vmem>>, vector<1x8x128xf32>,
    %c1_21 = arith.constant 1 : index
    %c0_22 = arith.constant 0 : index
    %c0_23 = arith.constant 0 : index
    %50 = vector.load %arg7[%c1_21, %c0_22, %c0_23] : memref<2x8x128xf32, #tpu.memory_space<vmem>>, vector<1x8x128xf32>
    %51 = vector.shape_cast %50 : vector<1x8x128xf32> to vector<8x128xf32>
    %52 = vector.shape_cast %42 : vector<8x128xf32> to vector<1x8x128xf32>
    tpu.vector_store %arg7[%c1_21, %c0_22, %c0_23], %52 {strides = array<i32>} : memref<2x8x128xf32, #tpu.memory_space<vmem>>, vector<1x8x128xf32>,
    return
  }
  func.func @transform_0(%arg0: i32) -> i32 {
    %c0_i32 = arith.constant 0 : i32
    %c0_i32_0 = arith.constant 0 : i32
    return %c0_i32 : i32
  }
  func.func @transform_1(%arg0: i32) -> (i32, i32) {
    %c0_i32 = arith.constant 0 : i32
    %c0_i32_0 = arith.constant 0 : i32
    return %arg0, %c0_i32 : i32, i32
  }
  func.func @transform_2(%arg0: i32) -> (i32, i32) {
    %c0_i32 = arith.constant 0 : i32
    %c0_i32_0 = arith.constant 0 : i32
    %c0_i32_1 = arith.constant 0 : i32
    return %c0_i32, %c0_i32_0 : i32, i32
  }
  func.func @transform_3(%arg0: i32) -> (i32, i32, i32) {
    %c0_i32 = arith.constant 0 : i32
    %c0_i32_0 = arith.constant 0 : i32
    %c0_i32_1 = arith.constant 0 : i32
    return %c0_i32, %arg0, %c0_i32_0 : i32, i32, i32
  }
  func.func @transform_4(%arg0: i32) -> (i32, i32) {
    %c0_i32 = arith.constant 0 : i32
    %c0_i32_0 = arith.constant 0 : i32
    return %arg0, %c0_i32 : i32, i32
  }
  func.func @transform_5(%arg0: i32) -> (i32, i32) {
    %c0_i32 = arith.constant 0 : i32
    %c0_i32_0 = arith.constant 0 : i32
    return %arg0, %c0_i32 : i32, i32
  }
  func.func @transform_6(%arg0: i32) -> (i32, i32, i32) {
    %c0_i32 = arith.constant 0 : i32
    %c0_i32_0 = arith.constant 0 : i32
    %c0_i32_1 = arith.constant 0 : i32
    return %c0_i32, %arg0, %c0_i32_0 : i32, i32, i32
  }
  func.func @transform_7(%arg0: i32) -> (i32, i32) {
    %c0_i32 = arith.constant 0 : i32
    %c0_i32_0 = arith.constant 0 : i32
    return %arg0, %c0_i32 : i32, i32
  }
}

</mosaic_0001>

<llo_original>
// kernel: tpu_custom_call.1
$region0: #{tpu_custom_call.1}
  #allocation0 [shape = 'u32[]', space=smem, size = 0x4, offset = 0x4, fixed_abs, tag = 'smem constant byte address 0x4 - core index']
  #allocation1 [shape = 'u32[144,128]{1,0:T(1,128)}', space=vmem, size = 0x12000, scoped, tag = 'internal scratch']
  %s0 = inlined_call_operand.hbm [shape: f32[6], index: 0, kind: input, shape index: {}]
  %s1 = inlined_call_operand.hbm [shape: f32[16,512], index: 1, kind: input, shape index: {}]
  %s2 = inlined_call_operand.hbm [shape: f32[512,256], index: 2, kind: input, shape index: {}]
  %s3 = inlined_call_operand.hbm [shape: f32[2,16,128], index: 3, kind: input, shape index: {}]
  %s4 = inlined_call_operand.hbm [shape: f32[16,128], index: 4, kind: input, shape index: {}]
  %s5 = inlined_call_operand.vmem [shape: f32[16,128], index: 5, kind: input, shape index: {}]
  %s6 = inlined_call_operand.hbm [shape: f32[2,16,128], index: 6, kind: output, shape index: {0}]
  %s7 = inlined_call_operand.hbm [shape: f32[16,128], index: 7, kind: output, shape index: {1}]
  %8 = xla_tuple %s6, %s7
  %s9 = sld [smem:[#allocation0]]
  $region85: #{tpu_custom_call.1} parent=0
    _
  %s11 = ssub.s32 1, %s9
  %s12 = scalar_select 0, %s11, %s9
  $region1: #{tpu_custom_call.1} parent=0
    #allocation2 [shape = 'u8[512]{0}', space=smem, size = 0x200, scoped, tag = 'input window, operand 0, single buffered']
    #allocation3 [shape = 's32[2]{0}', space=sflag, size = 0x8, scoped, tag = 'scoped memory for tpu_custom_call.1']
    #allocation4 [shape = 's32[2]{0}', space=sflag, size = 0x8, scoped, tag = 'scoped memory for tpu_custom_call.1']
    #allocation5 [shape = 's32[2]{0}', space=sflag, size = 0x8, scoped, tag = 'scoped memory for tpu_custom_call.1']
    #allocation6 [shape = 'u8[32768]{0}', space=vmem, size = 0x8000, scoped, tag = 'input window, operand 1']
    #allocation7 [shape = 'u8[524288]{0}', space=vmem, size = 0x80000, scoped, tag = 'input window, operand 2, single buffered']
    #allocation8 [shape = 's32[1]{0}', space=sflag, size = 0x4, scoped, tag = 'scoped memory for tpu_custom_call.1']
    #allocation9 [shape = 'u8[16384]{0}', space=vmem, size = 0x4000, scoped, tag = 'input window, operand 3']
    #allocation10 [shape = 'u8[8192]{0}', space=vmem, size = 0x2000, scoped, tag = 'input window, operand 4']
    #allocation11 [shape = 'u8[16384]{0}', space=vmem, size = 0x4000, scoped, tag = 'output window, operand 0']
    #allocation12 [shape = 'u8[8192]{0}', space=vmem, size = 0x2000, scoped, tag = 'output window, operand 1']
    #allocation13 [shape = 's32[2]{0}', space=sflag, size = 0x8, scoped, tag = 'scoped memory for tpu_custom_call.1']
    %13 = vsyncpa [#allocation5], 0
    %14 = vsyncpa [#allocation3], 0
    %s15 = scalar_lea.sflag [#allocation3], 1
    %16 = vsyncpa %s15, 0
    %17 = vsyncpa [#allocation8], 0
    %18 = vsyncpa [#allocation4], 0
    %s19 = scalar_lea.sflag [#allocation4], 1
    %20 = vsyncpa %s19, 0
    %21 = vsyncpa [#allocation13], 0
    %s22 = scalar_lea.sflag [#allocation13], 1
    %23 = vsyncpa %s22, 0
    loop: start=0, step=1, limit=4
    $region2: #{tpu_custom_call.1} parent=1 // loop_pre_header
      _
    $region3: #{tpu_custom_call.1} parent=1 // loop_header
      %s25 = sphi 0, %s29
      %p26 = scmp.ge.s32.totalorder %s25, 4
      %s33 = sphi 0, %s33
      %s35 = sphi 0, %s33
      %s36 = sphi 0, %s35
      %s50 = sphi 0, %s36
      %s56 = sphi 0, %s58
      %s59 = sphi 0, %s56
      %s60 = sphi 0, %s59
      %s76 = sphi 0, %s60
      %s80 = sphi 0, %s80
      %s82 = sphi 0, %s80
      %s83 = sphi 0, %s82
      %s97 = sphi 0, %s83
      %s103 = sphi 0, %s105
      %s106 = sphi 0, %s103
      %s107 = sphi 0, %s106
      %s123 = sphi 0, %s107
      %s129 = sphi 0, %s131
      %s132 = sphi 0, %s129
      %s133 = sphi 0, %s132
      %s149 = sphi 0, %s133
      %s155 = sphi 0, %s157
      %s158 = sphi 0, %s155
      %s159 = sphi 0, %s158
      %s175 = sphi 0, %s159
      %s181 = sphi 0, %s183
      %s184 = sphi 0, %s181
      %s185 = sphi 0, %s184
      %s201 = sphi 0, %s185
      %s207 = sphi 0, %s209
      %s210 = sphi 0, %s207
      %s211 = sphi 0, %s210
      %s227 = sphi 0, %s211
    $region4: #{tpu_custom_call.1} parent=1 // loop_header_branch
      %28 = sbr.rel (%p26) target = $region8
    $region5: #{tpu_custom_call.1} parent=1 // loop_body
      %s30 = ssub.s32 %s25, 1
      %s31 = ssub.s32 %s25, 2
      %s32 = sadd.s32 %s25, 1
      %s34 = sadd.s32 %s33, 1
      %p37 = scmp.eq.s32.totalorder %s25, 1
      %p38 = scmp.ne.s32.totalorder %s33, %s35
      %p39 = scmp.eq.s32.totalorder %s25, 0
      %p40 = por %p38, %p39
      %p41 = scmp.ne.s32.totalorder %s33, %s35
      %p42 = scmp.eq.s32.totalorder %s30, 1
      %p43 = por %p41, %p42
      %p44 = scmp.ne.s32.totalorder %s35, %s36
      %p45 = scmp.eq.s32.totalorder %s30, 0
      %p46 = por %p44, %p45
      %p47 = scmp.ne.s32.totalorder %s35, %s36
      %p48 = scmp.eq.s32.totalorder %s31, 1
      %p49 = por %p47, %p48
      %p51 = scmp.ne.s32.totalorder %s36, %s50
      %p52 = scmp.eq.s32.totalorder %s31, 0
      %p53 = por %p51, %p52
      %s54 = ssub.s32 %s25, %s32
      %p55 = scmp.eq.s32.totalorder %s54, 0
      %s57 = sadd.s32 %s56, 1
      %s58 = scalar_select %p55, %s56, %s57
      %p61 = pneg %p55
      %p62 = scmp.eq.s32.totalorder %s25, 1
      %p63 = por %p61, %p62
      %p64 = scmp.ne.s32.totalorder %s56, %s59
      %p65 = scmp.eq.s32.totalorder %s25, 0
      %p66 = por %p64, %p65
      %p67 = scmp.ne.s32.totalorder %s56, %s59
      %p68 = scmp.eq.s32.totalorder %s30, 1
      %p69 = por %p67, %p68
      %p70 = scmp.ne.s32.totalorder %s59, %s60
      %p71 = scmp.eq.s32.totalorder %s30, 0
      %p72 = por %p70, %p71
      %p73 = scmp.ne.s32.totalorder %s59, %s60
      %p74 = scmp.eq.s32.totalorder %s31, 1
      %p75 = por %p73, %p74
      %p77 = scmp.ne.s32.totalorder %s60, %s76
      %p78 = scmp.eq.s32.totalorder %s31, 0
      %p79 = por %p77, %p78
      %s81 = sadd.s32 %s80, 1
      %p84 = scmp.eq.s32.totalorder %s25, 1
      %p85 = scmp.ne.s32.totalorder %s80, %s82
      %p86 = scmp.eq.s32.totalorder %s25, 0
      %p87 = por %p85, %p86
      %p88 = scmp.ne.s32.totalorder %s80, %s82
      %p89 = scmp.eq.s32.totalorder %s30, 1
      %p90 = por %p88, %p89
      %p91 = scmp.ne.s32.totalorder %s82, %s83
      %p92 = scmp.eq.s32.totalorder %s30, 0
      %p93 = por %p91, %p92
      %p94 = scmp.ne.s32.totalorder %s82, %s83
      %p95 = scmp.eq.s32.totalorder %s31, 1
      %p96 = por %p94, %p95
      %p98 = scmp.ne.s32.totalorder %s83, %s97
      %p99 = scmp.eq.s32.totalorder %s31, 0
      %p100 = por %p98, %p99
      %s101 = ssub.s32 %s25, %s32
      %p102 = scmp.eq.s32.totalorder %s101, 0
      %s104 = sadd.s32 %s103, 1
      %s105 = scalar_select %p102, %s103, %s104
      %p108 = pneg %p102
      %p109 = scmp.eq.s32.totalorder %s25, 1
      %p110 = por %p108, %p109
      %p111 = scmp.ne.s32.totalorder %s103, %s106
      %p112 = scmp.eq.s32.totalorder %s25, 0
      %p113 = por %p111, %p112
      %p114 = scmp.ne.s32.totalorder %s103, %s106
      %p115 = scmp.eq.s32.totalorder %s30, 1
      %p116 = por %p114, %p115
      %p117 = scmp.ne.s32.totalorder %s106, %s107
      %p118 = scmp.eq.s32.totalorder %s30, 0
      %p119 = por %p117, %p118
      %p120 = scmp.ne.s32.totalorder %s106, %s107
      %p121 = scmp.eq.s32.totalorder %s31, 1
      %p122 = por %p120, %p121
      %p124 = scmp.ne.s32.totalorder %s107, %s123
      %p125 = scmp.eq.s32.totalorder %s31, 0
      %p126 = por %p124, %p125
      %s127 = ssub.s32 %s25, %s32
      %p128 = scmp.eq.s32.totalorder %s127, 0
      %s130 = sadd.s32 %s129, 1
      %s131 = scalar_select %p128, %s129, %s130
      %p134 = pneg %p128
      %p135 = scmp.eq.s32.totalorder %s25, 1
      %p136 = por %p134, %p135
      %p137 = scmp.ne.s32.totalorder %s129, %s132
      %p138 = scmp.eq.s32.totalorder %s25, 0
      %p139 = por %p137, %p138
      %p140 = scmp.ne.s32.totalorder %s129, %s132
      %p141 = scmp.eq.s32.totalorder %s30, 1
      %p142 = por %p140, %p141
      %p143 = scmp.ne.s32.totalorder %s132, %s133
      %p144 = scmp.eq.s32.totalorder %s30, 0
      %p145 = por %p143, %p144
      %p146 = scmp.ne.s32.totalorder %s132, %s133
      %p147 = scmp.eq.s32.totalorder %s31, 1
      %p148 = por %p146, %p147
      %p150 = scmp.ne.s32.totalorder %s133, %s149
      %p151 = scmp.eq.s32.totalorder %s31, 0
      %p152 = por %p150, %p151
      %s153 = ssub.s32 %s25, %s32
      %p154 = scmp.eq.s32.totalorder %s153, 0
      %s156 = sadd.s32 %s155, 1
      %s157 = scalar_select %p154, %s155, %s156
      %p160 = pneg %p154
      %p161 = scmp.eq.s32.totalorder %s25, 1
      %p162 = por %p160, %p161
      %p163 = scmp.ne.s32.totalorder %s155, %s158
      %p164 = scmp.eq.s32.totalorder %s25, 0
      %p165 = por %p163, %p164
      %p166 = scmp.ne.s32.totalorder %s155, %s158
      %p167 = scmp.eq.s32.totalorder %s30, 1
      %p168 = por %p166, %p167
      %p169 = scmp.ne.s32.totalorder %s158, %s159
      %p170 = scmp.eq.s32.totalorder %s30, 0
      %p171 = por %p169, %p170
      %p172 = scmp.ne.s32.totalorder %s158, %s159
      %p173 = scmp.eq.s32.totalorder %s31, 1
      %p174 = por %p172, %p173
      %p176 = scmp.ne.s32.totalorder %s159, %s175
      %p177 = scmp.eq.s32.totalorder %s31, 0
      %p178 = por %p176, %p177
      %s179 = ssub.s32 %s25, %s32
      %p180 = scmp.eq.s32.totalorder %s179, 0
      %s182 = sadd.s32 %s181, 1
      %s183 = scalar_select %p180, %s181, %s182
      %p186 = pneg %p180
      %p187 = scmp.eq.s32.totalorder %s25, 1
      %p188 = por %p186, %p187
      %p189 = scmp.ne.s32.totalorder %s181, %s184
      %p190 = scmp.eq.s32.totalorder %s25, 0
      %p191 = por %p189, %p190
      %p192 = scmp.ne.s32.totalorder %s181, %s184
      %p193 = scmp.eq.s32.totalorder %s30, 1
      %p194 = por %p192, %p193
      %p195 = scmp.ne.s32.totalorder %s184, %s185
      %p196 = scmp.eq.s32.totalorder %s30, 0
      %p197 = por %p195, %p196
      %p198 = scmp.ne.s32.totalorder %s184, %s185
      %p199 = scmp.eq.s32.totalorder %s31, 1
      %p200 = por %p198, %p199
      %p202 = scmp.ne.s32.totalorder %s185, %s201
      %p203 = scmp.eq.s32.totalorder %s31, 0
      %p204 = por %p202, %p203
      %s205 = ssub.s32 %s25, %s32
      %p206 = scmp.eq.s32.totalorder %s205, 0
      %s208 = sadd.s32 %s207, 1
      %s209 = scalar_select %p206, %s207, %s208
      %p212 = pneg %p206
      %p213 = scmp.eq.s32.totalorder %s25, 1
      %p214 = por %p212, %p213
      %p215 = scmp.ne.s32.totalorder %s207, %s210
      %p216 = scmp.eq.s32.totalorder %s25, 0
      %p217 = por %p215, %p216
      %p218 = scmp.ne.s32.totalorder %s207, %s210
      %p219 = scmp.eq.s32.totalorder %s30, 1
      %p220 = por %p218, %p219
      %p221 = scmp.ne.s32.totalorder %s210, %s211
      %p222 = scmp.eq.s32.totalorder %s30, 0
      %p223 = por %p221, %p222
      %p224 = scmp.ne.s32.totalorder %s210, %s211
      %p225 = scmp.eq.s32.totalorder %s31, 1
      %p226 = por %p224, %p225
      %p228 = scmp.ne.s32.totalorder %s211, %s227
      %p229 = scmp.eq.s32.totalorder %s31, 0
      %p230 = por %p228, %p229
      %p231 = scmp.le.s32.totalorder 1, %s25
      %p232 = scmp.lt.s32.totalorder %s25, 3
      %p233 = pnand %p231, %p232
      %p234 = pneg %p233
      // Predicated region
      $region9: #{tpu_custom_call.1} parent=5 // pred_check
        _
      $region10: #{tpu_custom_call.1} parent=5 // pred_check_branch
        %236 = sbr.rel (%p233) target = $region12
      $region11: #{tpu_custom_call.1} parent=5 // pred_region
        %s237 = ssub.s32 %s25, 1
        // Predicated region
        $region13: #{tpu_custom_call.1} parent=11 // pred_check
          %p238 = pneg %p46
        $region14: #{tpu_custom_call.1} parent=11 // pred_check_branch
          %240 = sbr.rel (%p238) target = $region16
        $region15: #{tpu_custom_call.1} parent=11 // pred_region
          %s242 = ssub.s32 16, 16
          %243 = vsyncadd [#allocation5], %s242
          %246 = dma.hbm_to_smem %s0, 16, [#allocation2], [#allocation5]
        $region16: #{tpu_custom_call.1} parent=11 // pred_fallthru
          _
        // Predicated region
        $region17: #{tpu_custom_call.1} parent=11 // pred_check
          %p247 = pneg %p93
        $region18: #{tpu_custom_call.1} parent=11 // pred_check_branch
          %249 = sbr.rel (%p247) target = $region20
        $region19: #{tpu_custom_call.1} parent=11 // pred_region
          %s251 = ssub.s32 16384, 16384
          %252 = vsyncadd [#allocation8], %s251
          %s253 = sshll.u32 [#allocation7], 4
          %s254 = int_to_ptr.vmem [resolvable:$true] %s253
          %259 = dma.hbm_to_vmem [thread:$0]  %s2, 16384, %s254, [#allocation8], 256, 256, 16
        $region20: #{tpu_custom_call.1} parent=11 // pred_fallthru
          _
      $region12: #{tpu_custom_call.1} parent=5 // pred_fallthru
        _
      %p260 = scmp.lt.s32.totalorder %s25, 2
      // Predicated region
      $region21: #{tpu_custom_call.1} parent=5 // pred_check
        %p261 = pneg %p260
      $region22: #{tpu_custom_call.1} parent=5 // pred_check_branch
        %263 = sbr.rel (%p261) target = $region24
      $region23: #{tpu_custom_call.1} parent=5 // pred_region
        // Predicated region
        $region25: #{tpu_custom_call.1} parent=23 // pred_check
          %p264 = pneg %p66
        $region26: #{tpu_custom_call.1} parent=23 // pred_check_branch
          %266 = sbr.rel (%p264) target = $region28
        $region27: #{tpu_custom_call.1} parent=23 // pred_region
          %s267 = sand.u32 %s25, 1
          %s268 = scalar_lea.sflag [#allocation3], %s267
          %s269 = sand.u32 %s56, 1
          %s270 = smul.addr %s269, 32
          %s271 = scalar_lea.vmem [#allocation6], %s270
          %s273 = ssub.s32 512, 512
          %274 = vsyncadd %s268, %s273
          %s275 = smul.addr %s25, 4
          %s276 = smul.addr %s275, 128
          %s277 = scalar_lea.hbm %s1, %s276
          %s279 = sshll.u32 %s271, 4
          %s280 = int_to_ptr.vmem [resolvable:$true] %s279
          %282 = dma.hbm_to_vmem [thread:$0]  %s277, 512, %s280, %s268
        $region28: #{tpu_custom_call.1} parent=23 // pred_fallthru
          _
        // Predicated region
        $region29: #{tpu_custom_call.1} parent=23 // pred_check
          %p283 = pneg %p113
        $region30: #{tpu_custom_call.1} parent=23 // pred_check_branch
          %285 = sbr.rel (%p283) target = $region32
        $region31: #{tpu_custom_call.1} parent=23 // pred_region
          %s286 = sand.u32 %s25, 1
          %s287 = scalar_lea.sflag [#allocation3], %s286
          %s288 = sand.u32 %s103, 1
          %s289 = smul.addr %s288, 16
          %s290 = scalar_lea.vmem [#allocation9], %s289
          %s292 = ssub.s32 256, 256
          %293 = vsyncadd %s287, %s292
          %s294 = smul.addr %s25, 128
          %s295 = scalar_lea.hbm %s3, %s294
          %s296 = sshll.u32 %s290, 4
          %s297 = int_to_ptr.vmem [resolvable:$true] %s296
          %302 = dma.hbm_to_vmem [thread:$0]  %s295, 256, %s297, %s287, 256, 128, 8
        $region32: #{tpu_custom_call.1} parent=23 // pred_fallthru
          _
        // Predicated region
        $region33: #{tpu_custom_call.1} parent=23 // pred_check
          %p303 = pneg %p139
        $region34: #{tpu_custom_call.1} parent=23 // pred_check_branch
          %305 = sbr.rel (%p303) target = $region36
        $region35: #{tpu_custom_call.1} parent=23 // pred_region
          %s306 = sand.u32 %s25, 1
          %s307 = scalar_lea.sflag [#allocation3], %s306
          %s308 = sand.u32 %s129, 1
          %s309 = smul.addr %s308, 8
          %s310 = scalar_lea.vmem [#allocation10], %s309
          %s312 = ssub.s32 128, 128
          %313 = vsyncadd %s307, %s312
          %s314 = smul.addr %s25, 128
          %s315 = scalar_lea.hbm %s4, %s314
          %s317 = sshll.u32 %s310, 4
          %s318 = int_to_ptr.vmem [resolvable:$true] %s317
          %320 = dma.hbm_to_vmem [thread:$0]  %s315, 128, %s318, %s307
        $region36: #{tpu_custom_call.1} parent=23 // pred_fallthru
          _
        // Predicated region
        $region37: #{tpu_custom_call.1} parent=23 // pred_check
          %p321 = pneg %p165
        $region38: #{tpu_custom_call.1} parent=23 // pred_check_branch
          %323 = sbr.rel (%p321) target = $region40
        $region39: #{tpu_custom_call.1} parent=23 // pred_region
          %p324 = scmp.lt.s32.totalorder %s25, 1
          %s325 = scalar_select %p324, %s25, 1
          %s326 = smul.addr %s325, 8
          %s327 = scalar_lea.vmem %s5, %s326
        $region40: #{tpu_custom_call.1} parent=23 // pred_fallthru
          _
      $region24: #{tpu_custom_call.1} parent=5 // pred_fallthru
        _
      %p328 = scmp.le.s32.totalorder 1, %s25
      %p329 = scmp.lt.s32.totalorder %s25, 3
      %p330 = pnand %p328, %p329
      %p331 = pneg %p330
      // Predicated region
      $region41: #{tpu_custom_call.1} parent=5 // pred_check
        _
      $region42: #{tpu_custom_call.1} parent=5 // pred_check_branch
        %333 = sbr.rel (%p330) target = $region44
      $region43: #{tpu_custom_call.1} parent=5 // pred_region
        %s334 = ssub.s32 %s25, 1
        // Predicated region
        $region45: #{tpu_custom_call.1} parent=43 // pred_check
          %p335 = pneg %p46
        $region46: #{tpu_custom_call.1} parent=43 // pred_check_branch
          %337 = sbr.rel (%p335) target = $region48
        $region47: #{tpu_custom_call.1} parent=43 // pred_region
          %338 = dma.done [#allocation5], 16
        $region48: #{tpu_custom_call.1} parent=43 // pred_fallthru
          _
        %s339 = sand.u32 %s30, 1
        %s340 = scalar_lea.sflag [#allocation3], %s339
        %s341 = sand.u32 %s59, 1
        %s342 = smul.addr %s341, 32
        %s343 = scalar_lea.vmem [#allocation6], %s342
        // Predicated region
        $region49: #{tpu_custom_call.1} parent=43 // pred_check
          %p344 = pneg %p72
        $region50: #{tpu_custom_call.1} parent=43 // pred_check_branch
          %346 = sbr.rel (%p344) target = $region52
        $region51: #{tpu_custom_call.1} parent=43 // pred_region
          %347 = dma.done %s340, 512
        $region52: #{tpu_custom_call.1} parent=43 // pred_fallthru
          _
        // Predicated region
        $region53: #{tpu_custom_call.1} parent=43 // pred_check
          %p348 = pneg %p93
        $region54: #{tpu_custom_call.1} parent=43 // pred_check_branch
          %350 = sbr.rel (%p348) target = $region56
        $region55: #{tpu_custom_call.1} parent=43 // pred_region
          %351 = dma.done [#allocation8], 16384
        $region56: #{tpu_custom_call.1} parent=43 // pred_fallthru
          _
        %s352 = sand.u32 %s30, 1
        %s353 = scalar_lea.sflag [#allocation3], %s352
        %s354 = sand.u32 %s106, 1
        %s355 = smul.addr %s354, 16
        %s356 = scalar_lea.vmem [#allocation9], %s355
        // Predicated region
        $region57: #{tpu_custom_call.1} parent=43 // pred_check
          %p357 = pneg %p119
        $region58: #{tpu_custom_call.1} parent=43 // pred_check_branch
          %359 = sbr.rel (%p357) target = $region60
        $region59: #{tpu_custom_call.1} parent=43 // pred_region
          %360 = dma.done %s353, 256
        $region60: #{tpu_custom_call.1} parent=43 // pred_fallthru
          _
        %s361 = sand.u32 %s30, 1
        %s362 = scalar_lea.sflag [#allocation3], %s361
        %s363 = sand.u32 %s132, 1
        %s364 = smul.addr %s363, 8
        %s365 = scalar_lea.vmem [#allocation10], %s364
        // Predicated region
        $region61: #{tpu_custom_call.1} parent=43 // pred_check
          %p366 = pneg %p145
        $region62: #{tpu_custom_call.1} parent=43 // pred_check_branch
          %368 = sbr.rel (%p366) target = $region64
        $region63: #{tpu_custom_call.1} parent=43 // pred_region
          %369 = dma.done %s362, 128
        $region64: #{tpu_custom_call.1} parent=43 // pred_fallthru
          _
        %370 = sfence
        %p371 = pneg %p46
        %p372 = pneg %p43
        %s373 = sand.u32 %s30, 1
        %s374 = scalar_lea.sflag [#allocation3], %s373
        %s375 = sand.u32 %s59, 1
        %s376 = smul.addr %s375, 32
        %s377 = scalar_lea.vmem [#allocation6], %s376
        %p378 = pneg %p72
        %p379 = pneg %p69
        %p380 = pneg %p93
        %p381 = pneg %p90
        %s382 = sand.u32 %s30, 1
        %s383 = scalar_lea.sflag [#allocation3], %s382
        %s384 = sand.u32 %s106, 1
        %s385 = smul.addr %s384, 16
        %s386 = scalar_lea.vmem [#allocation9], %s385
        %p387 = pneg %p119
        %p388 = pneg %p116
        %s389 = sand.u32 %s30, 1
        %s390 = scalar_lea.sflag [#allocation3], %s389
        %s391 = sand.u32 %s132, 1
        %s392 = smul.addr %s391, 8
        %s393 = scalar_lea.vmem [#allocation10], %s392
        %p394 = pneg %p145
        %p395 = pneg %p142
        %p396 = scmp.lt.s32.totalorder %s30, 1
        %s397 = scalar_select %p396, %s30, 1
        %s398 = smul.addr %s397, 8
        %s399 = scalar_lea.vmem %s5, %s398
        %p400 = pneg %p171
        %p401 = pneg %p168
        %p402 = pneg %p197
        %p403 = pneg %p194
        %s404 = sand.u32 %s184, 1
        %s405 = scalar_lea.sflag [#allocation4], %s404
        %s406 = sand.u32 %s184, 1
        %s407 = smul.addr %s406, 16
        %s408 = scalar_lea.vmem [#allocation11], %s407
        %p409 = pneg %p223
        %p410 = pneg %p220
        %s411 = sand.u32 %s210, 1
        %s412 = scalar_lea.sflag [#allocation13], %s411
        %s413 = sand.u32 %s210, 1
        %s414 = smul.addr %s413, 8
        %s415 = scalar_lea.vmem [#allocation12], %s414
        %p416 = scmp.lt.s32.totalorder %s30, 1
        %s417 = scalar_select %p416, %s30, 1
        %s418 = smul.addr %s417, 8
        %s419 = scalar_lea.vmem %s5, %s418
        %v420 = vld [vmem:[%s365] sm:$0xff]
        %v421 = vld [vmem:[%s356] sm:$0xff]
        %s422 = scalar_lea.vmem %s356, 8 [#allocation9]
        %v423 = vld [vmem:[%s422] sm:$0xff]
        %v424 = vld [vmem:[%s419] sm:$0xff]
        %v425 = vld [vmem:[%s343] sm:$0xff]
        %v426 = vld [vmem:[%s343 + $0x8] sm:$0xff]
        %v427 = vld [vmem:[%s343 + $0x10] sm:$0xff]
        %v428 = vld [vmem:[%s343 + $0x18] sm:$0xff]
        %v429 = vld [vmem:[#allocation7] sm:$0xff]
        %v430 = vld [vmem:[#allocation7 + $0x8] sm:$0xff]
        %v431 = vld [vmem:[#allocation7 + $0x10] sm:$0xff]
        %v432 = vld [vmem:[#allocation7 + $0x18] sm:$0xff]
        %v433 = vld [vmem:[#allocation7 + $0x20] sm:$0xff]
        %v434 = vld [vmem:[#allocation7 + $0x28] sm:$0xff]
        %v435 = vld [vmem:[#allocation7 + $0x30] sm:$0xff]
        %v436 = vld [vmem:[#allocation7 + $0x38] sm:$0xff]
        %v437 = vld [vmem:[#allocation7 + $0x40] sm:$0xff]
        %v438 = vld [vmem:[#allocation7 + $0x48] sm:$0xff]
        %v439 = vld [vmem:[#allocation7 + $0x50] sm:$0xff]
        %v440 = vld [vmem:[#allocation7 + $0x58] sm:$0xff]
        %v441 = vld [vmem:[#allocation7 + $0x60] sm:$0xff]
        %v442 = vld [vmem:[#allocation7 + $0x68] sm:$0xff]
        %v443 = vld [vmem:[#allocation7 + $0x70] sm:$0xff]
        %v444 = vld [vmem:[#allocation7 + $0x78] sm:$0xff]
        %v445 = vld [vmem:[#allocation7 + $0x80] sm:$0xff]
        %v446 = vld [vmem:[#allocation7 + $0x88] sm:$0xff]
        %v447 = vld [vmem:[#allocation7 + $0x90] sm:$0xff]
        %v448 = vld [vmem:[#allocation7 + $0x98] sm:$0xff]
        %v449 = vld [vmem:[#allocation7 + $0xa0] sm:$0xff]
        %v450 = vld [vmem:[#allocation7 + $0xa8] sm:$0xff]
        %v451 = vld [vmem:[#allocation7 + $0xb0] sm:$0xff]
        %v452 = vld [vmem:[#allocation7 + $0xb8] sm:$0xff]
        %v453 = vld [vmem:[#allocation7 + $0xc0] sm:$0xff]
        %v454 = vld [vmem:[#allocation7 + $0xc8] sm:$0xff]
        %v455 = vld [vmem:[#allocation7 + $0xd0] sm:$0xff]
        %v456 = vld [vmem:[#allocation7 + $0xd8] sm:$0xff]
        %v457 = vld [vmem:[#allocation7 + $0xe0] sm:$0xff]
        %v458 = vld [vmem:[#allocation7 + $0xe8] sm:$0xff]
        %v459 = vld [vmem:[#allocation7 + $0xf0] sm:$0xff]
        %v460 = vld [vmem:[#allocation7 + $0xf8] sm:$0xff]
        %v461 = vld [vmem:[#allocation7 + $0x100] sm:$0xff]
        %v462 = vld [vmem:[#allocation7 + $0x108] sm:$0xff]
        %v463 = vld [vmem:[#allocation7 + $0x110] sm:$0xff]
        %v464 = vld [vmem:[#allocation7 + $0x118] sm:$0xff]
        %v465 = vld [vmem:[#allocation7 + $0x120] sm:$0xff]
        %v466 = vld [vmem:[#allocation7 + $0x128] sm:$0xff]
        %v467 = vld [vmem:[#allocation7 + $0x130] sm:$0xff]
        %v468 = vld [vmem:[#allocation7 + $0x138] sm:$0xff]
        %v469 = vld [vmem:[#allocation7 + $0x140] sm:$0xff]
        %v470 = vld [vmem:[#allocation7 + $0x148] sm:$0xff]
        %v471 = vld [vmem:[#allocation7 + $0x150] sm:$0xff]
        %v472 = vld [vmem:[#allocation7 + $0x158] sm:$0xff]
        %v473 = vld [vmem:[#allocation7 + $0x160] sm:$0xff]
        %v474 = vld [vmem:[#allocation7 + $0x168] sm:$0xff]
        %v475 = vld [vmem:[#allocation7 + $0x170] sm:$0xff]
        %v476 = vld [vmem:[#allocation7 + $0x178] sm:$0xff]
        %v477 = vld [vmem:[#allocation7 + $0x180] sm:$0xff]
        %v478 = vld [vmem:[#allocation7 + $0x188] sm:$0xff]
        %v479 = vld [vmem:[#allocation7 + $0x190] sm:$0xff]
        %v480 = vld [vmem:[#allocation7 + $0x198] sm:$0xff]
        %v481 = vld [vmem:[#allocation7 + $0x1a0] sm:$0xff]
        %v482 = vld [vmem:[#allocation7 + $0x1a8] sm:$0xff]
        %v483 = vld [vmem:[#allocation7 + $0x1b0] sm:$0xff]
        %v484 = vld [vmem:[#allocation7 + $0x1b8] sm:$0xff]
        %v485 = vld [vmem:[#allocation7 + $0x1c0] sm:$0xff]
        %v486 = vld [vmem:[#allocation7 + $0x1c8] sm:$0xff]
        %v487 = vld [vmem:[#allocation7 + $0x1d0] sm:$0xff]
        %v488 = vld [vmem:[#allocation7 + $0x1d8] sm:$0xff]
        %v489 = vld [vmem:[#allocation7 + $0x1e0] sm:$0xff]
        %v490 = vld [vmem:[#allocation7 + $0x1e8] sm:$0xff]
        %v491 = vld [vmem:[#allocation7 + $0x1f0] sm:$0xff]
        %v492 = vld [vmem:[#allocation7 + $0x1f8] sm:$0xff]
        %v493 = vld [vmem:[#allocation7 + $0x200] sm:$0xff]
        %v494 = vld [vmem:[#allocation7 + $0x208] sm:$0xff]
        %v495 = vld [vmem:[#allocation7 + $0x210] sm:$0xff]
        %v496 = vld [vmem:[#allocation7 + $0x218] sm:$0xff]
        %v497 = vld [vmem:[#allocation7 + $0x220] sm:$0xff]
        %v498 = vld [vmem:[#allocation7 + $0x228] sm:$0xff]
        %v499 = vld [vmem:[#allocation7 + $0x230] sm:$0xff]
        %v500 = vld [vmem:[#allocation7 + $0x238] sm:$0xff]
        %v501 = vld [vmem:[#allocation7 + $0x240] sm:$0xff]
        %v502 = vld [vmem:[#allocation7 + $0x248] sm:$0xff]
        %v503 = vld [vmem:[#allocation7 + $0x250] sm:$0xff]
        %v504 = vld [vmem:[#allocation7 + $0x258] sm:$0xff]
        %v505 = vld [vmem:[#allocation7 + $0x260] sm:$0xff]
        %v506 = vld [vmem:[#allocation7 + $0x268] sm:$0xff]
        %v507 = vld [vmem:[#allocation7 + $0x270] sm:$0xff]
        %v508 = vld [vmem:[#allocation7 + $0x278] sm:$0xff]
        %v509 = vld [vmem:[#allocation7 + $0x280] sm:$0xff]
        %v510 = vld [vmem:[#allocation7 + $0x288] sm:$0xff]
        %v511 = vld [vmem:[#allocation7 + $0x290] sm:$0xff]
        %v512 = vld [vmem:[#allocation7 + $0x298] sm:$0xff]
        %v513 = vld [vmem:[#allocation7 + $0x2a0] sm:$0xff]
        %v514 = vld [vmem:[#allocation7 + $0x2a8] sm:$0xff]
        %v515 = vld [vmem:[#allocation7 + $0x2b0] sm:$0xff]
        %v516 = vld [vmem:[#allocation7 + $0x2b8] sm:$0xff]
        %v517 = vld [vmem:[#allocation7 + $0x2c0] sm:$0xff]
        %v518 = vld [vmem:[#allocation7 + $0x2c8] sm:$0xff]
        %v519 = vld [vmem:[#allocation7 + $0x2d0] sm:$0xff]
        %v520 = vld [vmem:[#allocation7 + $0x2d8] sm:$0xff]
        %v521 = vld [vmem:[#allocation7 + $0x2e0] sm:$0xff]
        %v522 = vld [vmem:[#allocation7 + $0x2e8] sm:$0xff]
        %v523 = vld [vmem:[#allocation7 + $0x2f0] sm:$0xff]
        %v524 = vld [vmem:[#allocation7 + $0x2f8] sm:$0xff]
        %v525 = vld [vmem:[#allocation7 + $0x300] sm:$0xff]
        %v526 = vld [vmem:[#allocation7 + $0x308] sm:$0xff]
        %v527 = vld [vmem:[#allocation7 + $0x310] sm:$0xff]
        %v528 = vld [vmem:[#allocation7 + $0x318] sm:$0xff]
        %v529 = vld [vmem:[#allocation7 + $0x320] sm:$0xff]
        %v530 = vld [vmem:[#allocation7 + $0x328] sm:$0xff]
        %v531 = vld [vmem:[#allocation7 + $0x330] sm:$0xff]
        %v532 = vld [vmem:[#allocation7 + $0x338] sm:$0xff]
        %v533 = vld [vmem:[#allocation7 + $0x340] sm:$0xff]
        %v534 = vld [vmem:[#allocation7 + $0x348] sm:$0xff]
        %v535 = vld [vmem:[#allocation7 + $0x350] sm:$0xff]
        %v536 = vld [vmem:[#allocation7 + $0x358] sm:$0xff]
        %v537 = vld [vmem:[#allocation7 + $0x360] sm:$0xff]
        %v538 = vld [vmem:[#allocation7 + $0x368] sm:$0xff]
        %v539 = vld [vmem:[#allocation7 + $0x370] sm:$0xff]
        %v540 = vld [vmem:[#allocation7 + $0x378] sm:$0xff]
        %v541 = vld [vmem:[#allocation7 + $0x380] sm:$0xff]
        %v542 = vld [vmem:[#allocation7 + $0x388] sm:$0xff]
        %v543 = vld [vmem:[#allocation7 + $0x390] sm:$0xff]
        %v544 = vld [vmem:[#allocation7 + $0x398] sm:$0xff]
        %v545 = vld [vmem:[#allocation7 + $0x3a0] sm:$0xff]
        %v546 = vld [vmem:[#allocation7 + $0x3a8] sm:$0xff]
        %v547 = vld [vmem:[#allocation7 + $0x3b0] sm:$0xff]
        %v548 = vld [vmem:[#allocation7 + $0x3b8] sm:$0xff]
        %v549 = vld [vmem:[#allocation7 + $0x3c0] sm:$0xff]
        %v550 = vld [vmem:[#allocation7 + $0x3c8] sm:$0xff]
        %v551 = vld [vmem:[#allocation7 + $0x3d0] sm:$0xff]
        %v552 = vld [vmem:[#allocation7 + $0x3d8] sm:$0xff]
        %v553 = vld [vmem:[#allocation7 + $0x3e0] sm:$0xff]
        %v554 = vld [vmem:[#allocation7 + $0x3e8] sm:$0xff]
        %v555 = vld [vmem:[#allocation7 + $0x3f0] sm:$0xff]
        %v556 = vld [vmem:[#allocation7 + $0x3f8] sm:$0xff]
        %557 = vmatprep.subr.mxu0 %v430
        %558 = vmatpush1.msra.mxu0 %v429
        %559 = vmatprep.subr.mxu0 %v432
        %560 = vmatpush1.msra.mxu0 %v431
        %561 = vmatprep.subr.mxu0 %v434
        %562 = vmatpush1.msra.mxu0 %v433
        %563 = vmatprep.subr.mxu0 %v436
        %564 = vmatpush1.msra.mxu0 %v435
        %565 = vmatprep.subr.mxu0 %v438
        %566 = vmatpush1.msra.mxu0 %v437
        %567 = vmatprep.subr.mxu0 %v440
        %568 = vmatpush1.msra.mxu0 %v439
        %569 = vmatprep.subr.mxu0 %v442
        %570 = vmatpush1.msra.mxu0 %v441
        %571 = vmatprep.subr.mxu0 %v444
        %572 = vmatpush1.msra.mxu0 %v443
        %573 = vmatprep.subr.mxu0 %v446
        %574 = vmatpush1.msra.mxu0 %v445
        %575 = vmatprep.subr.mxu0 %v448
        %576 = vmatpush1.msra.mxu0 %v447
        %577 = vmatprep.subr.mxu0 %v450
        %578 = vmatpush1.msra.mxu0 %v449
        %579 = vmatprep.subr.mxu0 %v452
        %580 = vmatpush1.msra.mxu0 %v451
        %581 = vmatprep.subr.mxu0 %v454
        %582 = vmatpush1.msra.mxu0 %v453
        %583 = vmatprep.subr.mxu0 %v456
        %584 = vmatpush1.msra.mxu0 %v455
        %585 = vmatprep.subr.mxu0 %v458
        %586 = vmatpush1.msra.mxu0 %v457
        %587 = vmatprep.subr.mxu0 %v460
        %588 = vmatpush1.msra.mxu0 %v459
        %589 = vmatprep.subr.mxu0 %v462
        %590 = vmatpush1.msra.mxu0 %v461
        %591 = vmatprep.subr.mxu0 %v464
        %592 = vmatpush1.msra.mxu0 %v463
        %593 = vmatprep.subr.mxu0 %v466
        %594 = vmatpush1.msra.mxu0 %v465
        %595 = vmatprep.subr.mxu0 %v468
        %596 = vmatpush1.msra.mxu0 %v467
        %597 = vmatprep.subr.mxu0 %v470
        %598 = vmatpush1.msra.mxu0 %v469
        %599 = vmatprep.subr.mxu0 %v472
        %600 = vmatpush1.msra.mxu0 %v471
        %601 = vmatprep.subr.mxu0 %v474
        %602 = vmatpush1.msra.mxu0 %v473
        %603 = vmatprep.subr.mxu0 %v476
        %604 = vmatpush1.msra.mxu0 %v475
        %605 = vmatprep.subr.mxu0 %v478
        %606 = vmatpush1.msra.mxu0 %v477
        %607 = vmatprep.subr.mxu0 %v480
        %608 = vmatpush1.msra.mxu0 %v479
        %609 = vmatprep.subr.mxu0 %v482
        %610 = vmatpush1.msra.mxu0 %v481
        %611 = vmatprep.subr.mxu0 %v484
        %612 = vmatpush1.msra.mxu0 %v483
        %613 = vmatprep.subr.mxu0 %v486
        %614 = vmatpush1.msra.mxu0 %v485
        %615 = vmatprep.subr.mxu0 %v488
        %616 = vmatpush1.msra.mxu0 %v487
        %617 = vmatprep.subr.mxu0 %v490
        %618 = vmatpush1.msra.mxu0 %v489
        %619 = vmatprep.subr.mxu0 %v492
        %620 = vmatpush1.msra.mxu0 %v491
        %621 = vmatprep.mubr.f32.mxu0 %v426
        %622 = vmatmul.mubr.f32.gmra.mrb[0].mxu0 %v425
        %v623 = vpop.f32.mrb[0].mxu0
        %v624 = vadd.f32 0.0, %v623
        %v625 = vpop.f32.mrb[0].mxu0
        %v626 = vadd.f32 0.0, %v625
        %627 = vdwg.mxu0
        %628 = vmatprep.subr.mxu0 %v494
        %629 = vmatpush1.msra.mxu0 %v493
        %630 = vmatprep.subr.mxu0 %v496
        %631 = vmatpush1.msra.mxu0 %v495
        %632 = vmatprep.subr.mxu0 %v498
        %633 = vmatpush1.msra.mxu0 %v497
        %634 = vmatprep.subr.mxu0 %v500
        %635 = vmatpush1.msra.mxu0 %v499
        %636 = vmatprep.subr.mxu0 %v502
        %637 = vmatpush1.msra.mxu0 %v501
        %638 = vmatprep.subr.mxu0 %v504
        %639 = vmatpush1.msra.mxu0 %v503
        %640 = vmatprep.subr.mxu0 %v506
        %641 = vmatpush1.msra.mxu0 %v505
        %642 = vmatprep.subr.mxu0 %v508
        %643 = vmatpush1.msra.mxu0 %v507
        %644 = vmatprep.subr.mxu0 %v510
        %645 = vmatpush1.msra.mxu0 %v509
        %646 = vmatprep.subr.mxu0 %v512
        %647 = vmatpush1.msra.mxu0 %v511
        %648 = vmatprep.subr.mxu0 %v514
        %649 = vmatpush1.msra.mxu0 %v513
        %650 = vmatprep.subr.mxu0 %v516
        %651 = vmatpush1.msra.mxu0 %v515
        %652 = vmatprep.subr.mxu0 %v518
        %653 = vmatpush1.msra.mxu0 %v517
        %654 = vmatprep.subr.mxu0 %v520
        %655 = vmatpush1.msra.mxu0 %v519
        %656 = vmatprep.subr.mxu0 %v522
        %657 = vmatpush1.msra.mxu0 %v521
        %658 = vmatprep.subr.mxu0 %v524
        %659 = vmatpush1.msra.mxu0 %v523
        %660 = vmatprep.subr.mxu0 %v526
        %661 = vmatpush1.msra.mxu0 %v525
        %662 = vmatprep.subr.mxu0 %v528
        %663 = vmatpush1.msra.mxu0 %v527
        %664 = vmatprep.subr.mxu0 %v530
        %665 = vmatpush1.msra.mxu0 %v529
        %666 = vmatprep.subr.mxu0 %v532
        %667 = vmatpush1.msra.mxu0 %v531
        %668 = vmatprep.subr.mxu0 %v534
        %669 = vmatpush1.msra.mxu0 %v533
        %670 = vmatprep.subr.mxu0 %v536
        %671 = vmatpush1.msra.mxu0 %v535
        %672 = vmatprep.subr.mxu0 %v538
        %673 = vmatpush1.msra.mxu0 %v537
        %674 = vmatprep.subr.mxu0 %v540
        %675 = vmatpush1.msra.mxu0 %v539
        %676 = vmatprep.subr.mxu0 %v542
        %677 = vmatpush1.msra.mxu0 %v541
        %678 = vmatprep.subr.mxu0 %v544
        %679 = vmatpush1.msra.mxu0 %v543
        %680 = vmatprep.subr.mxu0 %v546
        %681 = vmatpush1.msra.mxu0 %v545
        %682 = vmatprep.subr.mxu0 %v548
        %683 = vmatpush1.msra.mxu0 %v547
        %684 = vmatprep.subr.mxu0 %v550
        %685 = vmatpush1.msra.mxu0 %v549
        %686 = vmatprep.subr.mxu0 %v552
        %687 = vmatpush1.msra.mxu0 %v551
        %688 = vmatprep.subr.mxu0 %v554
        %689 = vmatpush1.msra.mxu0 %v553
        %690 = vmatprep.subr.mxu0 %v556
        %691 = vmatpush1.msra.mxu0 %v555
        %692 = vmatprep.mubr.f32.mxu0 %v428
        %693 = vmatmul.mubr.f32.gmra.mrb[0].mxu0 %v427
        %v694 = vpop.f32.mrb[0].mxu0
        %v695 = vadd.f32 %v624, %v694
        %v696 = vpop.f32.mrb[0].mxu0
        %v697 = vadd.f32 %v626, %v696
        %698 = vdwg.mxu0
        %s699 = sld [smem:[#allocation2]]
        %v700 = vstv %s699
        %v701 = vmul.f32 %v700, %v420
        %v702 = vadd.f32 %v695, %v701
        %s703 = sld [smem:[#allocation2 + $0x1]]
        %v704 = vstv %s703
        %v705 = vmul.f32 %v704, %v421
        %v706 = vadd.f32 %v702, %v705
        %s707 = sld [smem:[#allocation2 + $0x4]]
        %v708 = vstv %s707
        %v709 = vadd.f32 %v706, %v708
        %s710 = sld [smem:[#allocation2 + $0x2]]
        %v711 = vstv %s710
        %v712 = vmul.f32 %v711, %v420
        %v713 = vadd.f32 %v697, %v712
        %s714 = sld [smem:[#allocation2 + $0x3]]
        %v715 = vstv %s714
        %v716 = vmul.f32 %v715, %v423
        %v717 = vadd.f32 %v713, %v716
        %s718 = sld [smem:[#allocation2 + $0x5]]
        %v719 = vstv %s718
        %v720 = vadd.f32 %v717, %v719
        %v721 = vxor.u32 %v709, 2147483648
        %v722 = vmul.f32 %v721, 1.442695
        %v723 = vpow.pop %v722
        %v724 = vadd.f32 %v723, 1.0
        %v725 = vrcp.pop %v724
        %v726 = vmul.f32 1.0, %v725
        %v727 = vxor.u32 %v720, 2147483648
        %v728 = vmul.f32 %v727, 1.442695
        %v729 = vpow.pop %v728
        %v730 = vadd.f32 %v729, 1.0
        %v731 = vrcp.pop %v730
        %v732 = vmul.f32 1.0, %v731
        %v733 = vmul.f32 %v726, %v420
        %v734 = vmul.f32 %v732, %v424
        %v735 = vsub.f32 %v733, %v734
        %736 = vst [vmem:[%s415] sm:$0xff] %v735
        %737 = vst [vmem:[%s408] sm:$0xff] %v726
        %s738 = scalar_lea.vmem %s408, 8 [#allocation11]
        %739 = vst [vmem:[%s738] sm:$0xff] %v732
        %s740 = sand.u32 %s184, 1
        %s741 = scalar_lea.sflag [#allocation4], %s740
        %s742 = sand.u32 %s184, 1
        %s743 = smul.addr %s742, 16
        %s744 = scalar_lea.vmem [#allocation11], %s743
        %s745 = sand.u32 %s210, 1
        %s746 = scalar_lea.sflag [#allocation13], %s745
        %s747 = sand.u32 %s210, 1
        %s748 = smul.addr %s747, 8
        %s749 = scalar_lea.vmem [#allocation12], %s748
        // Predicated region
        $region65: #{tpu_custom_call.1} parent=43 // pred_check
          %p750 = pneg %p194
        $region66: #{tpu_custom_call.1} parent=43 // pred_check_branch
          %752 = sbr.rel (%p750) target = $region68
        $region67: #{tpu_custom_call.1} parent=43 // pred_region
          %s754 = ssub.s32 256, 256
          %755 = vsyncadd %s741, %s754
          %s756 = smul.addr %s30, 128
          %s757 = scalar_lea.hbm %s6, %s756
          %s758 = sshll.u32 %s744, 4
          %s759 = int_to_ptr.vmem [resolvable:$true] %s758
          %764 = dma.vmem_to_hbm [thread:$0]  %s759, 256, %s757, %s741, 128, 256, 8
        $region68: #{tpu_custom_call.1} parent=43 // pred_fallthru
          _
        // Predicated region
        $region69: #{tpu_custom_call.1} parent=43 // pred_check
          %p765 = pneg %p220
        $region70: #{tpu_custom_call.1} parent=43 // pred_check_branch
          %767 = sbr.rel (%p765) target = $region72
        $region71: #{tpu_custom_call.1} parent=43 // pred_region
          %s769 = ssub.s32 128, 128
          %770 = vsyncadd %s746, %s769
          %s771 = smul.addr %s30, 128
          %s772 = scalar_lea.hbm %s7, %s771
          %s774 = sshll.u32 %s749, 4
          %s775 = int_to_ptr.vmem [resolvable:$true] %s774
          %777 = dma.vmem_to_hbm [thread:$0]  %s775, 128, %s772, %s746
        $region72: #{tpu_custom_call.1} parent=43 // pred_fallthru
          _
      $region44: #{tpu_custom_call.1} parent=5 // pred_fallthru
        _
      %p778 = scmp.le.s32.totalorder 2, %s25
      // Predicated region
      $region73: #{tpu_custom_call.1} parent=5 // pred_check
        %p779 = pneg %p778
      $region74: #{tpu_custom_call.1} parent=5 // pred_check_branch
        %781 = sbr.rel (%p779) target = $region76
      $region75: #{tpu_custom_call.1} parent=5 // pred_region
        %s782 = ssub.s32 %s25, 2
        // Predicated region
        $region77: #{tpu_custom_call.1} parent=75 // pred_check
          %p783 = pneg %p200
        $region78: #{tpu_custom_call.1} parent=75 // pred_check_branch
          %785 = sbr.rel (%p783) target = $region80
        $region79: #{tpu_custom_call.1} parent=75 // pred_region
          %s786 = sand.u32 %s185, 1
          %s787 = scalar_lea.sflag [#allocation4], %s786
          %s788 = sand.u32 %s185, 1
          %s789 = smul.addr %s788, 16
          %s790 = scalar_lea.vmem [#allocation11], %s789
          %791 = dma.done %s787, 256
        $region80: #{tpu_custom_call.1} parent=75 // pred_fallthru
          _
        // Predicated region
        $region81: #{tpu_custom_call.1} parent=75 // pred_check
          %p792 = pneg %p226
        $region82: #{tpu_custom_call.1} parent=75 // pred_check_branch
          %794 = sbr.rel (%p792) target = $region84
        $region83: #{tpu_custom_call.1} parent=75 // pred_region
          %s795 = sand.u32 %s211, 1
          %s796 = scalar_lea.sflag [#allocation13], %s795
          %s797 = sand.u32 %s211, 1
          %s798 = smul.addr %s797, 8
          %s799 = scalar_lea.vmem [#allocation12], %s798
          %800 = dma.done %s796, 128
        $region84: #{tpu_custom_call.1} parent=75 // pred_fallthru
          _
      $region76: #{tpu_custom_call.1} parent=5 // pred_fallthru
        _
    $region6: #{tpu_custom_call.1} parent=1 // loop_footer
      %s29 = sadd.s32 1, %s25
    $region7: #{tpu_custom_call.1} parent=1 // loop_footer_branch
      %24 = sbr.rel target = $region3
    $region8: #{tpu_custom_call.1} parent=1 // loop_exit
      _
    %801 = vsyncpa [#allocation3], 1
    %s802 = scalar_lea.sflag [#allocation3], 1
    %803 = vsyncpa %s802, 1
    %804 = vsyncpa [#allocation8], 1
    %805 = vsyncpa [#allocation4], 1
    %s806 = scalar_lea.sflag [#allocation4], 1
    %807 = vsyncpa %s806, 1
    %808 = vsyncpa [#allocation13], 1
    %s809 = scalar_lea.sflag [#allocation13], 1
    %810 = vsyncpa %s809, 1
    %811 = vsyncpa [#allocation5], 1
    %s812 = scalar_lea.sflag [#allocation5], 1
    %813 = vsyncpa %s812, 1

</llo_original>
